<compile_context>
chip_gen: v5e
topology: v5e:2x2
jax: 0.10.0
libtpu: 0.0.40
codegen_flags: <defaults>
</compile_context>

<pallas_src>
import functools

import jax
import jax.numpy as jnp
from jax.experimental import pallas as pl
from jax.experimental.pallas import tpu as pltpu


def _spatial_attn_kernel(w_ref, x_ref, o_ref, sum_ref, max_ref, *,
                         kernel_size, c_total, block_c, needs_mask):
    # w_ref:   (2, K) f32 in SMEM (scalar prefetch); row 0 = avg taps, row 1 = max taps
    # x_ref:   (block_c, L) VMEM block (one batch element, one channel slab)
    # o_ref:   (1, L) VMEM output block (same block across the C axis)
    # sum_ref: (8, L) f32 running channel sum (per-sublane partials)
    # max_ref: (8, L) f32 running channel max (per-sublane partials)
    c = pl.program_id(1)
    n_c = pl.num_programs(1)
    L = x_ref.shape[-1]

    @pl.when(c == 0)
    def _():
        sum_ref[...] = jnp.zeros_like(sum_ref)
        max_ref[...] = jnp.full_like(max_ref, -jnp.inf)

    # ---- streaming channel reduction over this slab (VPU-only hot loop) ----
    if block_c % 8 == 0:
        nchunks = block_c // 8
        if needs_mask:
            # Tail block of an uneven grid: rows at global index >= C are
            # padding with unspecified contents -> mask them (sum: 0, max: -inf).
            row8 = jax.lax.broadcasted_iota(jnp.int32, (8, L), 0)  # hoisted
            rows_left = c_total - c * block_c

        def body(i, carry):
            start = pl.multiple_of(i * 8, 8)
            chunk = x_ref[pl.ds(start, 8), :].astype(jnp.float32)
            if needs_mask:
                valid = (i * 8 + row8) < rows_left
                chunk_s = jnp.where(valid, chunk, 0.0)
                chunk_m = jnp.where(valid, chunk, -jnp.inf)
            else:
                chunk_s = chunk
                chunk_m = chunk
            # Elementwise accumulate (VPU); no XLU reduce per chunk.
            sum_ref[...] = sum_ref[...] + chunk_s
            max_ref[...] = jnp.maximum(max_ref[...], chunk_m)
            return carry

        jax.lax.fori_loop(0, nchunks, body, 0, unroll=min(nchunks, 8))
    else:
        # block_c == C (single full-dim block; C tiny / not 8-aligned):
        # one whole-block sublane reduce is negligible here.
        xb = x_ref[...].astype(jnp.float32)
        sum_ref[0:1, :] = sum_ref[0:1, :] + jnp.sum(xb, axis=0, keepdims=True)
        max_ref[0:1, :] = jnp.maximum(max_ref[0:1, :],
                                      jnp.max(xb, axis=0, keepdims=True))

    # ---- finalize on the last channel block: mean, conv(k, zero-pad), sigmoid ----
    @pl.when(c == n_c - 1)
    def _():
        avg = jnp.sum(sum_ref[...], axis=0, keepdims=True) * jnp.float32(1.0 / c_total)
        mx = jnp.max(max_ref[...], axis=0, keepdims=True)
        feat = jnp.concatenate([avg, mx], axis=0)              # (2, L) packed

        lane = jax.lax.broadcasted_iota(jnp.int32, (2, L), 1)
        row = jax.lax.broadcasted_iota(jnp.int32, (2, L), 0)
        pad = (kernel_size - 1) // 2

        acc2 = jnp.zeros((2, L), jnp.float32)                  # per-row accumulator
        for k in range(kernel_size):                           # static unroll over taps
            s = k - pad                        # out[l] += w[r,k] * feat[r, l+s] (zero pad)
            valid = (lane + s >= 0) & (lane + s < L)
            shifted = pltpu.roll(feat, shift=(-s) % L, axis=1)  # one roll per tap
            shifted = jnp.where(valid, shifted, 0.0)            # one mask per tap
            wk = jnp.where(row == 0, w_ref[0, k], w_ref[1, k])  # per-row tap weight
            acc2 = acc2 + wk * shifted
        y = jnp.sum(acc2, axis=0, keepdims=True)                # combine rows once
        o_ref[...] = jax.nn.sigmoid(y).astype(o_ref.dtype)


def _vmem_budget():
    """(vmem_limit_bytes, max_block_bytes) tuned per TPU generation."""
    try:
        kind = jax.devices()[0].device_kind.lower()
    except Exception:
        kind = ""
    if ("v5 lite" in kind) or ("v5e" in kind) or ("v5lite" in kind):
        # v5e: 128 MiB physical, 16 MiB default scoped limit -> raise it.
        return 64 << 20, 8 << 20
    if "v6" in kind:
        # v6e: 128 MiB physical, 32 MiB default scoped limit.
        return 64 << 20, 16 << 20
    if "7" in kind:
        # v7x: only 64 MiB physical -> keep 2x block + scratch well under ~48 MiB.
        return 48 << 20, 12 << 20
    # Unknown (v4/v5p/interpret): conservative middle ground.
    return 48 << 20, 8 << 20


def _pick_block_c(C, L, itemsize, max_block_bytes):
    """Pick a channel tile <= max_block_bytes; multiple of 8 unless it is full C."""
    row_bytes = max(L * itemsize, 1)
    if C * row_bytes <= max_block_bytes:
        return C                                  # whole channel dim in one block
    cap = max(8, (max_block_bytes // row_bytes) // 8 * 8)
    steps_cap = -(-C // cap)
    # Prefer an even grid (multiple-of-8 divisor of C) when it costs no extra steps.
    best_div = 0
    for tc in range(cap, 7, -8):
        if C % tc == 0:
            best_div = tc
            break
    if best_div and (C // best_div) <= steps_cap:
        return best_div
    return cap                                    # uneven grid; kernel masks the tail


def spatial_attention(x, weight, *, kernel_size=7, block_c=None):
    """x: (N, C, L); weight: (1, 2, K) PyTorch Conv1d layout. Returns (N, 1, L)."""
    N, C, L = x.shape
    w2d = weight.reshape(2, kernel_size).astype(jnp.float32)

    vmem_limit, max_block_bytes = _vmem_budget()
    if block_c is None:
        block_c = _pick_block_c(C, L, jnp.dtype(x.dtype).itemsize, max_block_bytes)
    assert block_c == C or block_c % 8 == 0, (C, block_c)
    num_c_blocks = pl.cdiv(C, block_c)
    needs_mask = (C % block_c) != 0

    kernel = functools.partial(
        _spatial_attn_kernel, kernel_size=kernel_size, c_total=C,
        block_c=block_c, needs_mask=needs_mask)

    return pl.pallas_call(
        kernel,
        out_shape=jax.ShapeDtypeStruct((N, 1, L), x.dtype),
        grid_spec=pltpu.PrefetchScalarGridSpec(
            num_scalar_prefetch=1,                       # conv weights -> SMEM once
            grid=(N, num_c_blocks),                      # reduction axis last
            in_specs=[
                pl.BlockSpec((None, block_c, L), lambda n, c, w: (n, c, 0)),
            ],
            out_specs=pl.BlockSpec((None, 1, L), lambda n, c, w: (n, 0, 0)),
            scratch_shapes=[
                pltpu.VMEM((8, L), jnp.float32),         # running channel sum (per sublane)
                pltpu.VMEM((8, L), jnp.float32),         # running channel max (per sublane)
            ],
        ),
        compiler_params=pltpu.CompilerParams(
            dimension_semantics=("parallel", "arbitrary"),
            vmem_limit_bytes=vmem_limit,
        ),
    )(w2d, x)


def _reference(x, weight, kernel_size=7):
    # Pure-JAX reference mirroring the PyTorch module.
    avg = jnp.mean(x, axis=1, keepdims=True)
    mx = jnp.max(x, axis=1, keepdims=True)
    cat = jnp.concatenate([avg, mx], axis=1)             # (N, 2, L)
    pad = (kernel_size - 1) // 2
    out = jax.lax.conv_general_dilated(
        cat, weight,
        window_strides=(1,),
        padding=[(pad, pad)],
        dimension_numbers=("NCH", "OIH", "NCH"),
    )                                                    # (N, 1, L)
    return jax.nn.sigmoid(out)


if __name__ == "__main__":
    key = jax.random.PRNGKey(0)
    k_x, k_w, k_x2, k_x3, k_x4 = jax.random.split(key, 5)

    kernel_size = 7
    # Deterministic Conv1d weight, shape (out_ch=1, in_ch=2, K=7), no bias.
    weight = jax.random.normal(k_w, (1, 2, kernel_size), dtype=jnp.float32) * 0.1

    # Case 1: tiny module-sized input (single full-dim channel block).
    N, C, L = 2, 4, 16
    x = jax.random.normal(k_x, (N, C, L), dtype=jnp.float32)
    out = jax.block_until_ready(spatial_attention(x, weight, kernel_size=kernel_size))
    ref = _reference(x, weight, kernel_size=kernel_size)
    assert out.shape == (N, 1, L), out.shape
    assert jnp.allclose(out, ref, atol=1e-5, rtol=1e-5), (
        f"case1 max abs err {jnp.max(jnp.abs(out - ref))}")

    # Case 2: tiled channel reduction (even grid) + chunked VPU accumulation.
    N2, C2, L2 = 2, 16, 128
    x2 = jax.random.normal(k_x2, (N2, C2, L2), dtype=jnp.float32)
    out2 = jax.block_until_ready(
        spatial_attention(x2, weight, kernel_size=kernel_size, block_c=8))
    ref2 = _reference(x2, weight, kernel_size=kernel_size)
    assert jnp.allclose(out2, ref2, atol=1e-5, rtol=1e-5), (
        f"case2 max abs err {jnp.max(jnp.abs(out2 - ref2))}")

    # Case 3: uneven grid (C not a multiple of block_c) -> masked tail block.
    N3, C3, L3 = 2, 20, 128
    x3 = jax.random.normal(k_x3, (N3, C3, L3), dtype=jnp.float32)
    out3 = jax.block_until_ready(
        spatial_attention(x3, weight, kernel_size=kernel_size, block_c=16))
    ref3 = _reference(x3, weight, kernel_size=kernel_size)
    assert jnp.allclose(out3, ref3, atol=1e-5, rtol=1e-5), (
        f"case3 max abs err {jnp.max(jnp.abs(out3 - ref3))}")

    # Case 4: bf16 activations (half the HBM bytes; per-chunk f32 accumulation).
    N4, C4, L4 = 2, 32, 256
    x4 = jax.random.normal(k_x4, (N4, C4, L4), dtype=jnp.float32).astype(jnp.bfloat16)
    out4 = jax.block_until_ready(
        spatial_attention(x4, weight, kernel_size=kernel_size))
    ref4 = _reference(x4.astype(jnp.float32), weight, kernel_size=kernel_size)
    assert jnp.allclose(out4.astype(jnp.float32), ref4, atol=1e-2, rtol=1e-2), (
        f"case4 max abs err {jnp.max(jnp.abs(out4.astype(jnp.float32) - ref4))}")

    print("KERNEL_OK")
</pallas_src>

<mosaic_0001>
module attributes {stable_mosaic.version = 11 : i64} {
  func.func @_spatial_attn_kernel(%arg0: i32, %arg1: i32, %arg2: memref<2x7xf32, #tpu.memory_space<smem>>, %arg3: memref<1x4x16xf32, #tpu.memory_space<vmem>>, %arg4: memref<1x1x16xf32, #tpu.memory_space<vmem>>, %arg5: memref<8x16xf32, #tpu.memory_space<vmem>>, %arg6: memref<8x16xf32, #tpu.memory_space<vmem>>) attributes {dimension_semantics = [#tpu.dimension_semantics<parallel>, #tpu.dimension_semantics<arbitrary>], iteration_bounds = array<i64: 2, 1>, scalar_prefetch = 1 : i64, scratch_operands = 2 : i64, tpu.core_type = #tpu.core_type<tc>, window_params = [{transform_indices = @transform_0, window_bounds = array<i64: 1, 4, 16>}, {transform_indices = @transform_1, window_bounds = array<i64: 1, 1, 16>}]} {
    %c0_i32 = arith.constant 0 : i32
    %0 = arith.cmpi eq, %arg1, %c0_i32 : i32
    %1 = arith.extui %0 : i1 to i32
    %c0_i32_0 = arith.constant 0 : i32
    %2 = arith.cmpi ne, %1, %c0_i32_0 : i32
    scf.if %2 {
      %cst_14 = arith.constant 0.000000e+00 : f32
      %18 = vector.broadcast %cst_14 : f32 to vector<8x16xf32>
      %c0_15 = arith.constant 0 : index
      %c0_16 = arith.constant 0 : index
      %19 = vector.load %arg5[%c0_15, %c0_16] : memref<8x16xf32, #tpu.memory_space<vmem>>, vector<8x16xf32>
      tpu.vector_store %arg5[%c0_15, %c0_16], %18 {strides = array<i32>} : memref<8x16xf32, #tpu.memory_space<vmem>>, vector<8x16xf32>,
      %cst_17 = arith.constant 0xFF800000 : f32
      %20 = vector.broadcast %cst_17 : f32 to vector<8x16xf32>
      %c0_18 = arith.constant 0 : index
      %c0_19 = arith.constant 0 : index
      %21 = vector.load %arg6[%c0_18, %c0_19] : memref<8x16xf32, #tpu.memory_space<vmem>>, vector<8x16xf32>
      tpu.vector_store %arg6[%c0_18, %c0_19], %20 {strides = array<i32>} : memref<8x16xf32, #tpu.memory_space<vmem>>, vector<8x16xf32>,
    } else {
    }
    %c0 = arith.constant 0 : index
    %c0_1 = arith.constant 0 : index
    %c0_2 = arith.constant 0 : index
    %3 = vector.load %arg3[%c0, %c0_1, %c0_2] : memref<1x4x16xf32, #tpu.memory_space<vmem>>, vector<1x4x16xf32>
    %4 = vector.shape_cast %3 : vector<1x4x16xf32> to vector<4x16xf32>
    %c0_3 = arith.constant 0 : index
    %c0_4 = arith.constant 0 : index
    %5 = vector.load %arg5[%c0_3, %c0_4] : memref<8x16xf32, #tpu.memory_space<vmem>>, vector<1x16xf32>
    %cst = arith.constant dense<0.000000e+00> : vector<16xf32>
    %6 = vector.multi_reduction <add>, %4, %cst [0] : vector<4x16xf32> to vector<16xf32>
    %7 = vector.shape_cast %6 : vector<16xf32> to vector<1x16xf32>
    %8 = arith.addf %5, %7 : vector<1x16xf32>
    %c0_5 = arith.constant 0 : index
    %c0_6 = arith.constant 0 : index
    %9 = vector.load %arg5[%c0_5, %c0_6] : memref<8x16xf32, #tpu.memory_space<vmem>>, vector<1x16xf32>
    tpu.vector_store %arg5[%c0_5, %c0_6], %8 {strides = array<i32>} : memref<8x16xf32, #tpu.memory_space<vmem>>, vector<1x16xf32>,
    %c0_7 = arith.constant 0 : index
    %c0_8 = arith.constant 0 : index
    %10 = vector.load %arg6[%c0_7, %c0_8] : memref<8x16xf32, #tpu.memory_space<vmem>>, vector<1x16xf32>
    %cst_9 = arith.constant dense<0xFF800000> : vector<16xf32>
    %11 = vector.multi_reduction <maximumf>, %4, %cst_9 [0] : vector<4x16xf32> to vector<16xf32>
    %12 = vector.shape_cast %11 : vector<16xf32> to vector<1x16xf32>
    %13 = arith.maximumf %10, %12 : vector<1x16xf32>
    %c0_10 = arith.constant 0 : index
    %c0_11 = arith.constant 0 : index
    %14 = vector.load %arg6[%c0_10, %c0_11] : memref<8x16xf32, #tpu.memory_space<vmem>>, vector<1x16xf32>
    tpu.vector_store %arg6[%c0_10, %c0_11], %13 {strides = array<i32>} : memref<8x16xf32, #tpu.memory_space<vmem>>, vector<1x16xf32>,
    %c0_i32_12 = arith.constant 0 : i32
    %15 = arith.cmpi eq, %arg1, %c0_i32_12 : i32
    %16 = arith.extui %15 : i1 to i32
    %c0_i32_13 = arith.constant 0 : i32
    %17 = arith.cmpi ne, %16, %c0_i32_13 : i32
    scf.if %17 {
      %c0_14 = arith.constant 0 : index
      %c0_15 = arith.constant 0 : index
      %18 = vector.load %arg5[%c0_14, %c0_15] : memref<8x16xf32, #tpu.memory_space<vmem>>, vector<8x16xf32>
      %cst_16 = arith.constant dense<0.000000e+00> : vector<16xf32>
      %19 = vector.multi_reduction <add>, %18, %cst_16 [0] : vector<8x16xf32> to vector<16xf32>
      %20 = vector.shape_cast %19 : vector<16xf32> to vector<1x16xf32>
      %cst_17 = arith.constant 2.500000e-01 : f32
      %21 = vector.broadcast %cst_17 : f32 to vector<1x16xf32>
      %22 = arith.mulf %20, %21 : vector<1x16xf32>
      %c0_18 = arith.constant 0 : index
      %c0_19 = arith.constant 0 : index
      %23 = vector.load %arg6[%c0_18, %c0_19] : memref<8x16xf32, #tpu.memory_space<vmem>>, vector<8x16xf32>
      %cst_20 = arith.constant dense<0xFF800000> : vector<16xf32>
      %24 = vector.multi_reduction <maximumf>, %23, %cst_20 [0] : vector<8x16xf32> to vector<16xf32>
      %25 = vector.shape_cast %24 : vector<16xf32> to vector<1x16xf32>
      %26 = tpu.concatenate %22, %25 in 0 : vector<1x16xf32>, vector<1x16xf32> -> vector<2x16xf32>
      %27 = tpu.iota {dimensions = array<i32: 1>} : vector<2x16xi32>
      %28 = tpu.iota {dimensions = array<i32: 0>} : vector<2x16xi32>
      %cst_21 = arith.constant 0.000000e+00 : f32
      %29 = vector.broadcast %cst_21 : f32 to vector<2x16xf32>
      %c-3_i32 = arith.constant -3 : i32
      %30 = vector.broadcast %c-3_i32 : i32 to vector<2x16xi32>
      %31 = arith.addi %27, %30 : vector<2x16xi32>
      %c0_i32_22 = arith.constant 0 : i32
      %32 = vector.broadcast %c0_i32_22 : i32 to vector<2x16xi32>
      %33 = arith.cmpi sge, %31, %32 : vector<2x16xi32>
      %c-3_i32_23 = arith.constant -3 : i32
      %34 = vector.broadcast %c-3_i32_23 : i32 to vector<2x16xi32>
      %35 = arith.addi %27, %34 : vector<2x16xi32>
      %c16_i32 = arith.constant 16 : i32
      %36 = vector.broadcast %c16_i32 : i32 to vector<2x16xi32>
      %37 = arith.cmpi slt, %35, %36 : vector<2x16xi32>
      %38 = arith.andi %33, %37 : vector<2x16xi1>
      %c3_i32 = arith.constant 3 : i32
      %39 = tpu.dynamic_rotate %26 by %c3_i32 dim 1 : vector<2x16xf32>, i32 -> vector<2x16xf32>
      %cst_24 = arith.constant 0.000000e+00 : f32
      %40 = vector.broadcast %cst_24 : f32 to vector<2x16xf32>
      %41 = arith.select %38, %39, %40 : vector<2x16xi1>, vector<2x16xf32>
      %c0_i32_25 = arith.constant 0 : i32
      %42 = vector.broadcast %c0_i32_25 : i32 to vector<2x16xi32>
      %43 = arith.cmpi eq, %28, %42 : vector<2x16xi32>
      %c0_26 = arith.constant 0 : index
      %c0_27 = arith.constant 0 : index
      %44 = memref.load %arg2[%c0_26, %c0_27] : memref<2x7xf32, #tpu.memory_space<smem>>
      %c1 = arith.constant 1 : index
      %c0_28 = arith.constant 0 : index
      %45 = memref.load %arg2[%c1, %c0_28] : memref<2x7xf32, #tpu.memory_space<smem>>
      %46 = vector.broadcast %44 : f32 to vector<2x16xf32>
      %47 = vector.broadcast %45 : f32 to vector<2x16xf32>
      %48 = arith.select %43, %46, %47 : vector<2x16xi1>, vector<2x16xf32>
      %49 = arith.mulf %48, %41 : vector<2x16xf32>
      %50 = arith.addf %29, %49 : vector<2x16xf32>
      %c-2_i32 = arith.constant -2 : i32
      %51 = vector.broadcast %c-2_i32 : i32 to vector<2x16xi32>
      %52 = arith.addi %27, %51 : vector<2x16xi32>
      %c0_i32_29 = arith.constant 0 : i32
      %53 = vector.broadcast %c0_i32_29 : i32 to vector<2x16xi32>
      %54 = arith.cmpi sge, %52, %53 : vector<2x16xi32>
      %c-2_i32_30 = arith.constant -2 : i32
      %55 = vector.broadcast %c-2_i32_30 : i32 to vector<2x16xi32>
      %56 = arith.addi %27, %55 : vector<2x16xi32>
      %c16_i32_31 = arith.constant 16 : i32
      %57 = vector.broadcast %c16_i32_31 : i32 to vector<2x16xi32>
      %58 = arith.cmpi slt, %56, %57 : vector<2x16xi32>
      %59 = arith.andi %54, %58 : vector<2x16xi1>
      %c2_i32 = arith.constant 2 : i32
      %60 = tpu.dynamic_rotate %26 by %c2_i32 dim 1 : vector<2x16xf32>, i32 -> vector<2x16xf32>
      %cst_32 = arith.constant 0.000000e+00 : f32
      %61 = vector.broadcast %cst_32 : f32 to vector<2x16xf32>
      %62 = arith.select %59, %60, %61 : vector<2x16xi1>, vector<2x16xf32>
      %c0_i32_33 = arith.constant 0 : i32
      %63 = vector.broadcast %c0_i32_33 : i32 to vector<2x16xi32>
      %64 = arith.cmpi eq, %28, %63 : vector<2x16xi32>
      %c0_34 = arith.constant 0 : index
      %c1_35 = arith.constant 1 : index
      %65 = memref.load %arg2[%c0_34, %c1_35] : memref<2x7xf32, #tpu.memory_space<smem>>
      %c1_36 = arith.constant 1 : index
      %c1_37 = arith.constant 1 : index
      %66 = memref.load %arg2[%c1_36, %c1_37] : memref<2x7xf32, #tpu.memory_space<smem>>
      %67 = vector.broadcast %65 : f32 to vector<2x16xf32>
      %68 = vector.broadcast %66 : f32 to vector<2x16xf32>
      %69 = arith.select %64, %67, %68 : vector<2x16xi1>, vector<2x16xf32>
      %70 = arith.mulf %69, %62 : vector<2x16xf32>
      %71 = arith.addf %50, %70 : vector<2x16xf32>
      %c-1_i32 = arith.constant -1 : i32
      %72 = vector.broadcast %c-1_i32 : i32 to vector<2x16xi32>
      %73 = arith.addi %27, %72 : vector<2x16xi32>
      %c0_i32_38 = arith.constant 0 : i32
      %74 = vector.broadcast %c0_i32_38 : i32 to vector<2x16xi32>
      %75 = arith.cmpi sge, %73, %74 : vector<2x16xi32>
      %c-1_i32_39 = arith.constant -1 : i32
      %76 = vector.broadcast %c-1_i32_39 : i32 to vector<2x16xi32>
      %77 = arith.addi %27, %76 : vector<2x16xi32>
      %c16_i32_40 = arith.constant 16 : i32
      %78 = vector.broadcast %c16_i32_40 : i32 to vector<2x16xi32>
      %79 = arith.cmpi slt, %77, %78 : vector<2x16xi32>
      %80 = arith.andi %75, %79 : vector<2x16xi1>
      %c1_i32 = arith.constant 1 : i32
      %81 = tpu.dynamic_rotate %26 by %c1_i32 dim 1 : vector<2x16xf32>, i32 -> vector<2x16xf32>
      %cst_41 = arith.constant 0.000000e+00 : f32
      %82 = vector.broadcast %cst_41 : f32 to vector<2x16xf32>
      %83 = arith.select %80, %81, %82 : vector<2x16xi1>, vector<2x16xf32>
      %c0_i32_42 = arith.constant 0 : i32
      %84 = vector.broadcast %c0_i32_42 : i32 to vector<2x16xi32>
      %85 = arith.cmpi eq, %28, %84 : vector<2x16xi32>
      %c0_43 = arith.constant 0 : index
      %c2 = arith.constant 2 : index
      %86 = memref.load %arg2[%c0_43, %c2] : memref<2x7xf32, #tpu.memory_space<smem>>
      %c1_44 = arith.constant 1 : index
      %c2_45 = arith.constant 2 : index
      %87 = memref.load %arg2[%c1_44, %c2_45] : memref<2x7xf32, #tpu.memory_space<smem>>
      %88 = vector.broadcast %86 : f32 to vector<2x16xf32>
      %89 = vector.broadcast %87 : f32 to vector<2x16xf32>
      %90 = arith.select %85, %88, %89 : vector<2x16xi1>, vector<2x16xf32>
      %91 = arith.mulf %90, %83 : vector<2x16xf32>
      %92 = arith.addf %71, %91 : vector<2x16xf32>
      %c0_i32_46 = arith.constant 0 : i32
      %93 = vector.broadcast %c0_i32_46 : i32 to vector<2x16xi32>
      %94 = arith.addi %27, %93 : vector<2x16xi32>
      %c0_i32_47 = arith.constant 0 : i32
      %95 = vector.broadcast %c0_i32_47 : i32 to vector<2x16xi32>
      %96 = arith.cmpi sge, %94, %95 : vector<2x16xi32>
      %c0_i32_48 = arith.constant 0 : i32
      %97 = vector.broadcast %c0_i32_48 : i32 to vector<2x16xi32>
      %98 = arith.addi %27, %97 : vector<2x16xi32>
      %c16_i32_49 = arith.constant 16 : i32
      %99 = vector.broadcast %c16_i32_49 : i32 to vector<2x16xi32>
      %100 = arith.cmpi slt, %98, %99 : vector<2x16xi32>
      %101 = arith.andi %96, %100 : vector<2x16xi1>
      %c0_i32_50 = arith.constant 0 : i32
      %102 = tpu.dynamic_rotate %26 by %c0_i32_50 dim 1 : vector<2x16xf32>, i32 -> vector<2x16xf32>
      %cst_51 = arith.constant 0.000000e+00 : f32
      %103 = vector.broadcast %cst_51 : f32 to vector<2x16xf32>
      %104 = arith.select %101, %102, %103 : vector<2x16xi1>, vector<2x16xf32>
      %c0_i32_52 = arith.constant 0 : i32
      %105 = vector.broadcast %c0_i32_52 : i32 to vector<2x16xi32>
      %106 = arith.cmpi eq, %28, %105 : vector<2x16xi32>
      %c0_53 = arith.constant 0 : index
      %c3 = arith.constant 3 : index
      %107 = memref.load %arg2[%c0_53, %c3] : memref<2x7xf32, #tpu.memory_space<smem>>
      %c1_54 = arith.constant 1 : index
      %c3_55 = arith.constant 3 : index
      %108 = memref.load %arg2[%c1_54, %c3_55] : memref<2x7xf32, #tpu.memory_space<smem>>
      %109 = vector.broadcast %107 : f32 to vector<2x16xf32>
      %110 = vector.broadcast %108 : f32 to vector<2x16xf32>
      %111 = arith.select %106, %109, %110 : vector<2x16xi1>, vector<2x16xf32>
      %112 = arith.mulf %111, %104 : vector<2x16xf32>
      %113 = arith.addf %92, %112 : vector<2x16xf32>
      %c1_i32_56 = arith.constant 1 : i32
      %114 = vector.broadcast %c1_i32_56 : i32 to vector<2x16xi32>
      %115 = arith.addi %27, %114 : vector<2x16xi32>
      %c0_i32_57 = arith.constant 0 : i32
      %116 = vector.broadcast %c0_i32_57 : i32 to vector<2x16xi32>
      %117 = arith.cmpi sge, %115, %116 : vector<2x16xi32>
      %c1_i32_58 = arith.constant 1 : i32
      %118 = vector.broadcast %c1_i32_58 : i32 to vector<2x16xi32>
      %119 = arith.addi %27, %118 : vector<2x16xi32>
      %c16_i32_59 = arith.constant 16 : i32
      %120 = vector.broadcast %c16_i32_59 : i32 to vector<2x16xi32>
      %121 = arith.cmpi slt, %119, %120 : vector<2x16xi32>
      %122 = arith.andi %117, %121 : vector<2x16xi1>
      %c15_i32 = arith.constant 15 : i32
      %123 = tpu.dynamic_rotate %26 by %c15_i32 dim 1 : vector<2x16xf32>, i32 -> vector<2x16xf32>
      %cst_60 = arith.constant 0.000000e+00 : f32
      %124 = vector.broadcast %cst_60 : f32 to vector<2x16xf32>
      %125 = arith.select %122, %123, %124 : vector<2x16xi1>, vector<2x16xf32>
      %c0_i32_61 = arith.constant 0 : i32
      %126 = vector.broadcast %c0_i32_61 : i32 to vector<2x16xi32>
      %127 = arith.cmpi eq, %28, %126 : vector<2x16xi32>
      %c0_62 = arith.constant 0 : index
      %c4 = arith.constant 4 : index
      %128 = memref.load %arg2[%c0_62, %c4] : memref<2x7xf32, #tpu.memory_space<smem>>
      %c1_63 = arith.constant 1 : index
      %c4_64 = arith.constant 4 : index
      %129 = memref.load %arg2[%c1_63, %c4_64] : memref<2x7xf32, #tpu.memory_space<smem>>
      %130 = vector.broadcast %128 : f32 to vector<2x16xf32>
      %131 = vector.broadcast %129 : f32 to vector<2x16xf32>
      %132 = arith.select %127, %130, %131 : vector<2x16xi1>, vector<2x16xf32>
      %133 = arith.mulf %132, %125 : vector<2x16xf32>
      %134 = arith.addf %113, %133 : vector<2x16xf32>
      %c2_i32_65 = arith.constant 2 : i32
      %135 = vector.broadcast %c2_i32_65 : i32 to vector<2x16xi32>
      %136 = arith.addi %27, %135 : vector<2x16xi32>
      %c0_i32_66 = arith.constant 0 : i32
      %137 = vector.broadcast %c0_i32_66 : i32 to vector<2x16xi32>
      %138 = arith.cmpi sge, %136, %137 : vector<2x16xi32>
      %c2_i32_67 = arith.constant 2 : i32
      %139 = vector.broadcast %c2_i32_67 : i32 to vector<2x16xi32>
      %140 = arith.addi %27, %139 : vector<2x16xi32>
      %c16_i32_68 = arith.constant 16 : i32
      %141 = vector.broadcast %c16_i32_68 : i32 to vector<2x16xi32>
      %142 = arith.cmpi slt, %140, %141 : vector<2x16xi32>
      %143 = arith.andi %138, %142 : vector<2x16xi1>
      %c14_i32 = arith.constant 14 : i32
      %144 = tpu.dynamic_rotate %26 by %c14_i32 dim 1 : vector<2x16xf32>, i32 -> vector<2x16xf32>
      %cst_69 = arith.constant 0.000000e+00 : f32
      %145 = vector.broadcast %cst_69 : f32 to vector<2x16xf32>
      %146 = arith.select %143, %144, %145 : vector<2x16xi1>, vector<2x16xf32>
      %c0_i32_70 = arith.constant 0 : i32
      %147 = vector.broadcast %c0_i32_70 : i32 to vector<2x16xi32>
      %148 = arith.cmpi eq, %28, %147 : vector<2x16xi32>
      %c0_71 = arith.constant 0 : index
      %c5 = arith.constant 5 : index
      %149 = memref.load %arg2[%c0_71, %c5] : memref<2x7xf32, #tpu.memory_space<smem>>
      %c1_72 = arith.constant 1 : index
      %c5_73 = arith.constant 5 : index
      %150 = memref.load %arg2[%c1_72, %c5_73] : memref<2x7xf32, #tpu.memory_space<smem>>
      %151 = vector.broadcast %149 : f32 to vector<2x16xf32>
      %152 = vector.broadcast %150 : f32 to vector<2x16xf32>
      %153 = arith.select %148, %151, %152 : vector<2x16xi1>, vector<2x16xf32>
      %154 = arith.mulf %153, %146 : vector<2x16xf32>
      %155 = arith.addf %134, %154 : vector<2x16xf32>
      %c3_i32_74 = arith.constant 3 : i32
      %156 = vector.broadcast %c3_i32_74 : i32 to vector<2x16xi32>
      %157 = arith.addi %27, %156 : vector<2x16xi32>
      %c0_i32_75 = arith.constant 0 : i32
      %158 = vector.broadcast %c0_i32_75 : i32 to vector<2x16xi32>
      %159 = arith.cmpi sge, %157, %158 : vector<2x16xi32>
      %c3_i32_76 = arith.constant 3 : i32
      %160 = vector.broadcast %c3_i32_76 : i32 to vector<2x16xi32>
      %161 = arith.addi %27, %160 : vector<2x16xi32>
      %c16_i32_77 = arith.constant 16 : i32
      %162 = vector.broadcast %c16_i32_77 : i32 to vector<2x16xi32>
      %163 = arith.cmpi slt, %161, %162 : vector<2x16xi32>
      %164 = arith.andi %159, %163 : vector<2x16xi1>
      %c13_i32 = arith.constant 13 : i32
      %165 = tpu.dynamic_rotate %26 by %c13_i32 dim 1 : vector<2x16xf32>, i32 -> vector<2x16xf32>
      %cst_78 = arith.constant 0.000000e+00 : f32
      %166 = vector.broadcast %cst_78 : f32 to vector<2x16xf32>
      %167 = arith.select %164, %165, %166 : vector<2x16xi1>, vector<2x16xf32>
      %c0_i32_79 = arith.constant 0 : i32
      %168 = vector.broadcast %c0_i32_79 : i32 to vector<2x16xi32>
      %169 = arith.cmpi eq, %28, %168 : vector<2x16xi32>
      %c0_80 = arith.constant 0 : index
      %c6 = arith.constant 6 : index
      %170 = memref.load %arg2[%c0_80, %c6] : memref<2x7xf32, #tpu.memory_space<smem>>
      %c1_81 = arith.constant 1 : index
      %c6_82 = arith.constant 6 : index
      %171 = memref.load %arg2[%c1_81, %c6_82] : memref<2x7xf32, #tpu.memory_space<smem>>
      %172 = vector.broadcast %170 : f32 to vector<2x16xf32>
      %173 = vector.broadcast %171 : f32 to vector<2x16xf32>
      %174 = arith.select %169, %172, %173 : vector<2x16xi1>, vector<2x16xf32>
      %175 = arith.mulf %174, %167 : vector<2x16xf32>
      %176 = arith.addf %155, %175 : vector<2x16xf32>
      %cst_83 = arith.constant dense<0.000000e+00> : vector<16xf32>
      %177 = vector.multi_reduction <add>, %176, %cst_83 [0] : vector<2x16xf32> to vector<16xf32>
      %178 = vector.shape_cast %177 : vector<16xf32> to vector<1x16xf32>
      %179 = arith.negf %178 : vector<1x16xf32>
      %180 = math.exp %179 : vector<1x16xf32>
      %cst_84 = arith.constant 1.000000e+00 : f32
      %181 = vector.broadcast %cst_84 : f32 to vector<1x16xf32>
      %182 = arith.addf %181, %180 : vector<1x16xf32>
      %183 = arith.divf %181, %182 : vector<1x16xf32>
      %c0_85 = arith.constant 0 : index
      %c0_86 = arith.constant 0 : index
      %c0_87 = arith.constant 0 : index
      %184 = vector.load %arg4[%c0_85, %c0_86, %c0_87] : memref<1x1x16xf32, #tpu.memory_space<vmem>>, vector<1x1x16xf32>
      %185 = vector.shape_cast %184 : vector<1x1x16xf32> to vector<1x16xf32>
      %186 = vector.shape_cast %183 : vector<1x16xf32> to vector<1x1x16xf32>
      tpu.vector_store %arg4[%c0_85, %c0_86, %c0_87], %186 {strides = array<i32>} : memref<1x1x16xf32, #tpu.memory_space<vmem>>, vector<1x1x16xf32>,
    } else {
    }
    return
  }
  func.func @transform_0(%arg0: i32, %arg1: i32, %arg2: memref<2x7xf32, #tpu.memory_space<smem>>) -> (i32, i32, i32) {
    %c0_i32 = arith.constant 0 : i32
    %c0_i32_0 = arith.constant 0 : i32
    return %arg0, %arg1, %c0_i32 : i32, i32, i32
  }
  func.func @transform_1(%arg0: i32, %arg1: i32, %arg2: memref<2x7xf32, #tpu.memory_space<smem>>) -> (i32, i32, i32) {
    %c0_i32 = arith.constant 0 : i32
    %c0_i32_0 = arith.constant 0 : i32
    %c0_i32_1 = arith.constant 0 : i32
    return %arg0, %c0_i32, %c0_i32_0 : i32, i32, i32
  }
}

</mosaic_0001>

<llo_original>
// kernel: tpu_custom_call.1
$region0: #{tpu_custom_call.1}
  #allocation0 [shape = 'u32[]', space=smem, size = 0x4, offset = 0x4, fixed_abs, tag = 'smem constant byte address 0x4 - core index']
  #allocation1 [shape = 'u32[72,128]{1,0:T(1,128)}', space=vmem, size = 0x9000, scoped, tag = 'internal scratch']
  #allocation2 [shape = 'f32[8,16]{1,0:T(8,128)}', space=vmem, size = 0x1000, scoped, tag = 'scratch operand']
  #allocation3 [shape = 'f32[8,16]{1,0:T(8,128)}', space=vmem, size = 0x1000, scoped, tag = 'scratch operand']
  #allocation4 [shape = 's32[1]{0}', space=sflag, size = 0x4, scoped, tag = 'scoped memory for tpu_custom_call.1']
  #allocation5 [shape = 'u8[1024]{0}', space=smem, size = 0x400, scoped, tag = 'prefetched SMEM operand 0']
  %s0 = inlined_call_operand.hbm [shape: f32[2,7], index: 0, kind: input, shape index: {}]
  %s1 = inlined_call_operand.hbm [shape: f32[2,4,16], index: 1, kind: input, shape index: {}]
  %s2 = inlined_call_operand.hbm [shape: f32[2,1,16], index: 2, kind: output, shape index: {}]
  %s3 = sld [smem:[#allocation0]]
  $region49: #{tpu_custom_call.1} parent=0
    _
  %s5 = ssub.s32 1, %s3
  %s6 = scalar_select 0, %s5, %s3
  %s8 = sshll.u32 %s0, 4
  %s9 = int_to_ptr.hbm [resolvable:$true] %s8
  %11 = dma.hbm_to_smem %s9, 32, [#allocation5], [#allocation4]
  %13 = dma.done [#allocation4], 32
  %14 = sfence
  $region1: #{tpu_custom_call.1} parent=0
    #allocation6 [shape = 'u8[4096]{0}', space=vmem, size = 0x1000, scoped, tag = 'input window, operand 1']
    #allocation7 [shape = 's32[2]{0}', space=sflag, size = 0x8, scoped, tag = 'scoped memory for tpu_custom_call.1']
    #allocation8 [shape = 's32[2]{0}', space=sflag, size = 0x8, scoped, tag = 'scoped memory for tpu_custom_call.1']
    #allocation9 [shape = 'u8[1024]{0}', space=vmem, size = 0x400, scoped, tag = 'output window, operand 0']
    %15 = vsyncpa [#allocation7], 0
    %s16 = scalar_lea.sflag [#allocation7], 1
    %17 = vsyncpa %s16, 0
    %18 = vsyncpa [#allocation8], 0
    %s19 = scalar_lea.sflag [#allocation8], 1
    %20 = vsyncpa %s19, 0
    loop: start=0, step=1, limit=4
    $region2: #{tpu_custom_call.1} parent=1 // loop_pre_header
      _
    $region3: #{tpu_custom_call.1} parent=1 // loop_header
      %s22 = sphi 0, %s26
      %p23 = scmp.ge.s32.totalorder %s22, 4
      %s29 = sphi 0, %s41
      %s30 = sphi 0, %s37
      %s31 = sphi 0, %s29
      %s32 = sphi 0, %s30
      %s33 = sphi 0, %s31
      %s34 = sphi 0, %s32
      %s46 = sphi 0, %s48
      %s49 = sphi 0, %s46
      %s50 = sphi 0, %s49
      %s66 = sphi 0, %s50
      %s72 = sphi 0, %s74
      %s75 = sphi 0, %s72
      %s76 = sphi 0, %s75
      %s92 = sphi 0, %s76
    $region4: #{tpu_custom_call.1} parent=1 // loop_header_branch
      %25 = sbr.rel (%p23) target = $region8
    $region5: #{tpu_custom_call.1} parent=1 // loop_body
      %s27 = ssub.s32 %s22, 1
      %s28 = ssub.s32 %s22, 2
      %s35 = sadd.s32 1, %s30
      %p36 = scmp.ge.s32.totalorder %s35, 1
      %s37 = scalar_select %p36, 0, %s35
      %s38 = sadd.s32 1, %s29
      %s39 = scalar_select %p36, %s38, %s29
      %p40 = scmp.ge.s32.totalorder %s39, 2
      %s41 = scalar_select %p40, 0, %s39
      %s42 = ssub.s32 %s29, %s41
      %s43 = ssub.s32 %s30, %s37
      %s44 = sor.u32 %s42, %s43
      %p45 = scmp.eq.s32.totalorder %s44, 0
      %s47 = sadd.s32 %s46, 1
      %s48 = scalar_select %p45, %s46, %s47
      %p51 = pneg %p45
      %p52 = scmp.eq.s32.totalorder %s22, 1
      %p53 = por %p51, %p52
      %p54 = scmp.ne.s32.totalorder %s46, %s49
      %p55 = scmp.eq.s32.totalorder %s22, 0
      %p56 = por %p54, %p55
      %p57 = scmp.ne.s32.totalorder %s46, %s49
      %p58 = scmp.eq.s32.totalorder %s27, 1
      %p59 = por %p57, %p58
      %p60 = scmp.ne.s32.totalorder %s49, %s50
      %p61 = scmp.eq.s32.totalorder %s27, 0
      %p62 = por %p60, %p61
      %p63 = scmp.ne.s32.totalorder %s49, %s50
      %p64 = scmp.eq.s32.totalorder %s28, 1
      %p65 = por %p63, %p64
      %p67 = scmp.ne.s32.totalorder %s50, %s66
      %p68 = scmp.eq.s32.totalorder %s28, 0
      %p69 = por %p67, %p68
      %s70 = ssub.s32 %s29, %s41
      %p71 = scmp.eq.s32.totalorder %s70, 0
      %s73 = sadd.s32 %s72, 1
      %s74 = scalar_select %p71, %s72, %s73
      %p77 = pneg %p71
      %p78 = scmp.eq.s32.totalorder %s22, 1
      %p79 = por %p77, %p78
      %p80 = scmp.ne.s32.totalorder %s72, %s75
      %p81 = scmp.eq.s32.totalorder %s22, 0
      %p82 = por %p80, %p81
      %p83 = scmp.ne.s32.totalorder %s72, %s75
      %p84 = scmp.eq.s32.totalorder %s27, 1
      %p85 = por %p83, %p84
      %p86 = scmp.ne.s32.totalorder %s75, %s76
      %p87 = scmp.eq.s32.totalorder %s27, 0
      %p88 = por %p86, %p87
      %p89 = scmp.ne.s32.totalorder %s75, %s76
      %p90 = scmp.eq.s32.totalorder %s28, 1
      %p91 = por %p89, %p90
      %p93 = scmp.ne.s32.totalorder %s76, %s92
      %p94 = scmp.eq.s32.totalorder %s28, 0
      %p95 = por %p93, %p94
      %p96 = scmp.le.s32.totalorder 1, %s22
      %p97 = scmp.lt.s32.totalorder %s22, 3
      %p98 = pnand %p96, %p97
      %p99 = pneg %p98
      // Predicated region
      $region9: #{tpu_custom_call.1} parent=5 // pred_check
        _
      $region10: #{tpu_custom_call.1} parent=5 // pred_check_branch
        %101 = sbr.rel (%p98) target = $region12
      $region11: #{tpu_custom_call.1} parent=5 // pred_region
        %s102 = ssub.s32 %s22, 1
      $region12: #{tpu_custom_call.1} parent=5 // pred_fallthru
        _
      %p103 = scmp.lt.s32.totalorder %s22, 2
      // Predicated region
      $region13: #{tpu_custom_call.1} parent=5 // pred_check
        %p104 = pneg %p103
      $region14: #{tpu_custom_call.1} parent=5 // pred_check_branch
        %106 = sbr.rel (%p104) target = $region16
      $region15: #{tpu_custom_call.1} parent=5 // pred_region
        // Predicated region
        $region17: #{tpu_custom_call.1} parent=15 // pred_check
          %p107 = pneg %p56
        $region18: #{tpu_custom_call.1} parent=15 // pred_check_branch
          %109 = sbr.rel (%p107) target = $region20
        $region19: #{tpu_custom_call.1} parent=15 // pred_region
          %s110 = sand.u32 %s46, 1
          %s111 = scalar_lea.sflag [#allocation7], %s110
          %s112 = sand.u32 %s46, 1
          %s113 = smul.addr %s112, 4
          %s114 = scalar_lea.vmem [#allocation6], %s113
          %116 = vsyncadd %s111, 0
          %s117 = sadd.s32 %s30, %s29
          %s118 = smul.addr %s117, 4
          %s119 = scalar_lea.hbm %s1, %s118
          %s121 = sshll.u32 %s119, 4
          %s122 = int_to_ptr.hbm [resolvable:$true] %s121
          %s123 = sshll.u32 %s114, 4
          %s124 = int_to_ptr.vmem [resolvable:$true] %s123
          %126 = dma.hbm_to_vmem [thread:$0]  %s122, 64, %s124, %s111
        $region20: #{tpu_custom_call.1} parent=15 // pred_fallthru
          _
      $region16: #{tpu_custom_call.1} parent=5 // pred_fallthru
        _
      %p127 = scmp.le.s32.totalorder 1, %s22
      %p128 = scmp.lt.s32.totalorder %s22, 3
      %p129 = pnand %p127, %p128
      %p130 = pneg %p129
      // Predicated region
      $region21: #{tpu_custom_call.1} parent=5 // pred_check
        _
      $region22: #{tpu_custom_call.1} parent=5 // pred_check_branch
        %132 = sbr.rel (%p129) target = $region24
      $region23: #{tpu_custom_call.1} parent=5 // pred_region
        %s133 = ssub.s32 %s22, 1
        %s134 = sand.u32 %s49, 1
        %s135 = scalar_lea.sflag [#allocation7], %s134
        %s136 = sand.u32 %s49, 1
        %s137 = smul.addr %s136, 4
        %s138 = scalar_lea.vmem [#allocation6], %s137
        // Predicated region
        $region25: #{tpu_custom_call.1} parent=23 // pred_check
          %p139 = pneg %p62
        $region26: #{tpu_custom_call.1} parent=23 // pred_check_branch
          %141 = sbr.rel (%p139) target = $region28
        $region27: #{tpu_custom_call.1} parent=23 // pred_region
          %143 = dma.done %s135, 64
        $region28: #{tpu_custom_call.1} parent=23 // pred_fallthru
          _
        %s144 = sand.u32 %s49, 1
        %s145 = scalar_lea.sflag [#allocation7], %s144
        %s146 = sand.u32 %s49, 1
        %s147 = smul.addr %s146, 4
        %s148 = scalar_lea.vmem [#allocation6], %s147
        %p149 = pneg %p62
        %p150 = pneg %p59
        %p151 = pneg %p88
        %p152 = pneg %p85
        %s153 = sand.u32 %s75, 1
        %s154 = scalar_lea.sflag [#allocation8], %s153
        %s155 = sand.u32 %s75, 1
        %s156 = scalar_lea.vmem [#allocation9], %s155
        %p157 = scmp.eq.s32.totalorder %s32, 0
        // Predicated region
        $region29: #{tpu_custom_call.1} parent=23 // pred_check
          %p158 = pneg %p157
        $region30: #{tpu_custom_call.1} parent=23 // pred_check_branch
          %160 = sbr.rel (%p158) target = $region32
        $region31: #{tpu_custom_call.1} parent=23 // pred_region
          %vm161 = vcmask 130048
          %162 = vst.msk [vmem:[#allocation2] sm:$0xff] %vm161, 0.0
          %163 = vst.msk [vmem:[#allocation3] sm:$0xff] %vm161, -inf
        $region32: #{tpu_custom_call.1} parent=23 // pred_fallthru
          _
        %v164 = vld [vmem:[%s138] sm:$0xf]
        %v165 = vld [vmem:[#allocation2] sm:$0x1]
        %vm166 = vcmask 125952
        %v167 = vsel %vm166, %v164, 0.0
        %v168 = vrot.slane %v167, 4
        %v169 = vadd.f32 %v167, %v168
        %v170 = vrot.slane %v169, 2
        %v171 = vadd.f32 %v169, %v170
        %v172 = vrot.slane %v171, 1
        %v173 = vadd.f32 %v171, %v172
        %v174 = vadd.f32 %v165, %v173
        %vm175 = vcmask 122880
        %176 = vst.msk [vmem:[#allocation2] sm:$0x1] %vm175, %v174
        %v177 = vld [vmem:[#allocation3] sm:$0x1]
        %v178 = vsel %vm166, %v164, -inf
        %v179 = vrot.slane %v178, 4
        %v180 = vmax.f32 %v178, %v179
        %v181 = vrot.slane %v180, 2
        %v182 = vmax.f32 %v180, %v181
        %v183 = vrot.slane %v182, 1
        %v184 = vmax.f32 %v182, %v183
        %v185 = vmax.f32 %v177, %v184
        %186 = vst.msk [vmem:[#allocation3] sm:$0x1] %vm175, %v185
        // Predicated region
        $region33: #{tpu_custom_call.1} parent=23 // pred_check
          %p187 = pneg %p157
        $region34: #{tpu_custom_call.1} parent=23 // pred_check_branch
          %189 = sbr.rel (%p187) target = $region36
        $region35: #{tpu_custom_call.1} parent=23 // pred_region
          %v190 = vld [vmem:[#allocation2] sm:$0xff]
          %vm191 = vcmask 130048
          %v192 = vsel %vm191, %v190, 0.0
          %v193 = vrot.slane %v192, 4
          %v194 = vadd.f32 %v192, %v193
          %v195 = vrot.slane %v194, 2
          %v196 = vadd.f32 %v194, %v195
          %v197 = vrot.slane %v196, 1
          %v198 = vadd.f32 %v196, %v197
          %v199 = vmul.f32 %v198, 0.25
          %v200 = vld [vmem:[#allocation3] sm:$0xff]
          %v201 = vsel %vm191, %v200, -inf
          %v202 = vrot.slane %v201, 4
          %v203 = vmax.f32 %v201, %v202
          %v204 = vrot.slane %v203, 2
          %v205 = vmax.f32 %v203, %v204
          %v206 = vrot.slane %v205, 1
          %v207 = vmax.f32 %v205, %v206
          %vm208 = vcmask 1040384
          %v209 = vsel %vm208, %v199, %v207
          %v210 = vlaneseq
          %v211 = vand.u32 %v210, 127
          %v212 = vlaneseq
          %v213 = vshrl.u32 %v212, 7
          %v214 = vadd.s32 %v211, 4294967293
          %vm215 = vcmp.ge.s32.totalorder %v214, 0
          %vm216 = vcmp.lt.s32.totalorder %v214, 16
          %vm217 = vmand %vm215, %vm216
          %vm218 = vcmask 1047680
          %219 = vrot.lane.b32.xlu0 %v209, 16
          %v220 = vpop.permute.xlu0 %219
          %v221 = vsel %vm218, %v220, %v209
          %222 = vrot.lane.b32.xlu0 %v221, 16
          %v223 = vpop.permute.xlu0 %222
          %v224 = vsel %vm218, %v223, %v209
          %226 = vrot.lane.b32.xlu0 %v224, 115
          %v227 = vpop.permute.xlu0 %226
          %v229 = vsel %vm217, %v227, 0.0
          %vm230 = vcmp.eq.s32.totalorder %v213, 0
          %s231 = sld [smem:[#allocation5]]
          %s232 = sld [smem:[#allocation5 + $0x80]]
          %v233 = vstv %s231
          %v234 = vstv %s232
          %v235 = vsel %vm230, %v233, %v234
          %v236 = vmul.f32 %v235, %v229
          %v237 = vadd.f32 %v236, 0.0
          %v238 = vadd.s32 %v211, 4294967294
          %vm239 = vcmp.ge.s32.totalorder %v238, 0
          %vm240 = vcmp.lt.s32.totalorder %v238, 16
          %vm241 = vmand %vm239, %vm240
          %242 = vrot.lane.b32.xlu0 %v224, 114
          %v243 = vpop.permute.xlu0 %242
          %v245 = vsel %vm241, %v243, 0.0
          %s246 = sld [smem:[#allocation5 + $0x1]]
          %s247 = sld [smem:[#allocation5 + $0x81]]
          %v248 = vstv %s246
          %v249 = vstv %s247
          %v250 = vsel %vm230, %v248, %v249
          %v251 = vmul.f32 %v250, %v245
          %v252 = vadd.f32 %v237, %v251
          %v253 = vadd.s32 %v211, 4294967295
          %vm254 = vcmp.ge.s32.totalorder %v253, 0
          %vm255 = vcmp.lt.s32.totalorder %v253, 16
          %vm256 = vmand %vm254, %vm255
          %257 = vrot.lane.b32.xlu0 %v224, 113
          %v258 = vpop.permute.xlu0 %257
          %v260 = vsel %vm256, %v258, 0.0
          %s261 = sld [smem:[#allocation5 + $0x2]]
          %s262 = sld [smem:[#allocation5 + $0x82]]
          %v263 = vstv %s261
          %v264 = vstv %s262
          %v265 = vsel %vm230, %v263, %v264
          %v266 = vmul.f32 %v265, %v260
          %v267 = vadd.f32 %v252, %v266
          %vm268 = vcmp.ge.s32.totalorder %v211, 0
          %vm269 = vcmp.lt.s32.totalorder %v211, 16
          %vm270 = vmand %vm268, %vm269
          %271 = vrot.lane.b32.xlu0 %v224, 112
          %v272 = vpop.permute.xlu0 %271
          %v274 = vsel %vm270, %v272, 0.0
          %s275 = sld [smem:[#allocation5 + $0x3]]
          %s276 = sld [smem:[#allocation5 + $0x83]]
          %v277 = vstv %s275
          %v278 = vstv %s276
          %v279 = vsel %vm230, %v277, %v278
          %v280 = vmul.f32 %v279, %v274
          %v281 = vadd.f32 %v267, %v280
          %v282 = vadd.s32 %v211, 1
          %vm283 = vcmp.ge.s32.totalorder %v282, 0
          %vm284 = vcmp.lt.s32.totalorder %v282, 16
          %vm285 = vmand %vm283, %vm284
          %286 = vrot.lane.b32.xlu0 %v224, 127
          %v287 = vpop.permute.xlu0 %286
          %v289 = vsel %vm285, %v287, 0.0
          %s290 = sld [smem:[#allocation5 + $0x4]]
          %s291 = sld [smem:[#allocation5 + $0x84]]
          %v292 = vstv %s290
          %v293 = vstv %s291
          %v294 = vsel %vm230, %v292, %v293
          %v295 = vmul.f32 %v294, %v289
          %v296 = vadd.f32 %v281, %v295
          %v297 = vadd.s32 %v211, 2
          %vm298 = vcmp.ge.s32.totalorder %v297, 0
          %vm299 = vcmp.lt.s32.totalorder %v297, 16
          %vm300 = vmand %vm298, %vm299
          %301 = vrot.lane.b32.xlu0 %v224, 126
          %v302 = vpop.permute.xlu0 %301
          %v304 = vsel %vm300, %v302, 0.0
          %s305 = sld [smem:[#allocation5 + $0x5]]
          %s306 = sld [smem:[#allocation5 + $0x85]]
          %v307 = vstv %s305
          %v308 = vstv %s306
          %v309 = vsel %vm230, %v307, %v308
          %v310 = vmul.f32 %v309, %v304
          %v311 = vadd.f32 %v296, %v310
          %v312 = vadd.s32 %v211, 3
          %vm313 = vcmp.ge.s32.totalorder %v312, 0
          %vm314 = vcmp.lt.s32.totalorder %v312, 16
          %vm315 = vmand %vm313, %vm314
          %316 = vrot.lane.b32.xlu0 %v224, 125
          %v317 = vpop.permute.xlu0 %316
          %v319 = vsel %vm315, %v317, 0.0
          %s320 = sld [smem:[#allocation5 + $0x6]]
          %s321 = sld [smem:[#allocation5 + $0x86]]
          %v322 = vstv %s320
          %v323 = vstv %s321
          %v324 = vsel %vm230, %v322, %v323
          %v325 = vmul.f32 %v324, %v319
          %v326 = vadd.f32 %v311, %v325
          %vm327 = vcmask 123904
          %v328 = vsel %vm327, %v326, 0.0
          %v329 = vrot.slane %v328, 4
          %v330 = vadd.f32 %v328, %v329
          %v331 = vrot.slane %v330, 2
          %v332 = vadd.f32 %v330, %v331
          %v333 = vrot.slane %v332, 1
          %v334 = vadd.f32 %v332, %v333
          %v335 = vxor.u32 %v334, 2147483648
          %v336 = vmul.f32 %v335, 1.442695
          %v337 = vpow.pop %v336
          %v338 = vadd.f32 %v337, 1.0
          %v339 = vrcp.pop %v338
          %v340 = vmul.f32 %v338, %v339
          %v341 = vsub.f32 1.0, %v340
          %v342 = vmul.f32 %v339, %v341
          %v343 = vadd.f32 %v339, %v342
          %vm344 = vweird.f32 %v338
          %vm345 = vweird.f32 %v339
          %vm346 = vmor %vm344, %vm345
          %v347 = vsel %vm346, %v339, %v343
          %v348 = vand.u32 2147483647, %v338
          %vm349 = vcmp.eq.f32.partialorder %v348, 8.507059e+37
          %v350 = vand.u32 %v338, 2147483648
          %v351 = vor.u32 1.1754944e-38, %v350
          %v352 = vsel %vm349, %v351, %v347
          %v353 = vmul.f32 1.0, %v352
          %354 = vst.msk [vmem:[%s156] sm:$0x1] %vm175, %v353
        $region36: #{tpu_custom_call.1} parent=23 // pred_fallthru
          _
        %s355 = sand.u32 %s75, 1
        %s356 = scalar_lea.sflag [#allocation8], %s355
        %s357 = sand.u32 %s75, 1
        %s358 = scalar_lea.vmem [#allocation9], %s357
        // Predicated region
        $region37: #{tpu_custom_call.1} parent=23 // pred_check
          %p359 = pneg %p85
        $region38: #{tpu_custom_call.1} parent=23 // pred_check_branch
          %361 = sbr.rel (%p359) target = $region40
        $region39: #{tpu_custom_call.1} parent=23 // pred_region
          %363 = vsyncadd %s356, 0
          %s364 = scalar_lea.hbm %s2, %s31
          %s366 = sshll.u32 %s358, 4
          %s367 = int_to_ptr.vmem [resolvable:$true] %s366
          %s368 = sshll.u32 %s364, 4
          %s369 = int_to_ptr.hbm [resolvable:$true] %s368
          %371 = dma.vmem_to_hbm [thread:$0]  %s367, 16, %s369, %s356
        $region40: #{tpu_custom_call.1} parent=23 // pred_fallthru
          _
      $region24: #{tpu_custom_call.1} parent=5 // pred_fallthru
        _
      %p372 = scmp.le.s32.totalorder 2, %s22
      // Predicated region
      $region41: #{tpu_custom_call.1} parent=5 // pred_check
        %p373 = pneg %p372
      $region42: #{tpu_custom_call.1} parent=5 // pred_check_branch
        %375 = sbr.rel (%p373) target = $region44
      $region43: #{tpu_custom_call.1} parent=5 // pred_region
        %s376 = ssub.s32 %s22, 2
        // Predicated region
        $region45: #{tpu_custom_call.1} parent=43 // pred_check
          %p377 = pneg %p91
        $region46: #{tpu_custom_call.1} parent=43 // pred_check_branch
          %379 = sbr.rel (%p377) target = $region48
        $region47: #{tpu_custom_call.1} parent=43 // pred_region
          %s380 = sand.u32 %s76, 1
          %s381 = scalar_lea.sflag [#allocation8], %s380
          %s382 = sand.u32 %s76, 1
          %s383 = scalar_lea.vmem [#allocation9], %s382
          %385 = dma.done %s381, 16
        $region48: #{tpu_custom_call.1} parent=43 // pred_fallthru
          _
      $region44: #{tpu_custom_call.1} parent=5 // pred_fallthru
        _
    $region6: #{tpu_custom_call.1} parent=1 // loop_footer
      %s26 = sadd.s32 1, %s22
    $region7: #{tpu_custom_call.1} parent=1 // loop_footer_branch
      %21 = sbr.rel target = $region3
    $region8: #{tpu_custom_call.1} parent=1 // loop_exit
      _
    %386 = vsyncpa [#allocation7], 1
    %s387 = scalar_lea.sflag [#allocation7], 1
    %388 = vsyncpa %s387, 1
    %389 = vsyncpa [#allocation8], 1
    %s390 = scalar_lea.sflag [#allocation8], 1
    %391 = vsyncpa %s390, 1

</llo_original>
